<compile_context>
chip_gen: v6e
topology: v6e:2x2x1
jax: 0.10.0
libtpu: 0.0.40
codegen_flags: <defaults>
</compile_context>

<pallas_src>
import jax
import jax.numpy as jnp
from jax.experimental import pallas as pl
from jax.experimental.pallas import tpu as pltpu


def _add_neg_kernel(x_ref, o_ref):
    x = x_ref[...]
    o_ref[...] = x + (-x)   # x1 + torch.neg(x1)


def _lane_dense_view_shape(n_elems: int):
    """Pick a 2D (rows, lane) factorization with lane a large multiple of 128."""
    for lane in (1024, 896, 768, 640, 512, 384, 256, 128):
        if n_elems % lane == 0:
            return (n_elems // lane, lane)
    # Fallback: single row, full extent (still a full-array block -> always legal).
    return (1, n_elems)


def add_neg(x: jax.Array) -> jax.Array:
    """Computes x + (-x) elementwise via a single-block Pallas TPU kernel.

    Accepts any shape, returns the same shape/dtype (NCHW in / NCHW out).
    """
    orig_shape = x.shape
    view_shape = _lane_dense_view_shape(x.size)
    x2d = x.reshape(view_shape)

    out2d = pl.pallas_call(
        _add_neg_kernel,
        out_shape=jax.ShapeDtypeStruct(view_shape, x.dtype),
        # Whole array as one VMEM-resident block; grid=() so there is no
        # per-step pipelining overhead for this tiny, memory-bound op.
        in_specs=[pl.BlockSpec(memory_space=pltpu.MemorySpace.VMEM)],
        out_specs=pl.BlockSpec(memory_space=pltpu.MemorySpace.VMEM),
    )(x2d)

    return out2d.reshape(orig_shape)


if __name__ == "__main__":
    key = jax.random.PRNGKey(0)
    # Small NCHW input consistent with the module's forward (original uses
    # torch.randn(1, 3, 224, 224); we test a smaller deterministic shape).
    x1 = jax.random.normal(key, (2, 4, 16, 16), dtype=jnp.float32)

    out = add_neg(x1)
    out = jax.block_until_ready(out)

    # Reference: x1 + (-x1)
    expected = x1 + (-x1)
    assert out.shape == x1.shape
    assert out.dtype == x1.dtype
    assert jnp.allclose(out, expected), "mismatch vs reference"

    print("KERNEL_OK")
</pallas_src>

<mosaic_0001>
module attributes {stable_mosaic.version = 11 : i64} {
  func.func @_add_neg_kernel(%arg0: memref<2x1024xf32, #tpu.memory_space<vmem>>, %arg1: memref<2x1024xf32, #tpu.memory_space<vmem>>) attributes {dimension_semantics = [], scalar_prefetch = 0 : i64, scratch_operands = 0 : i64, tpu.core_type = #tpu.core_type<tc>} {
    %c0 = arith.constant 0 : index
    %c0_0 = arith.constant 0 : index
    %0 = vector.load %arg0[%c0, %c0_0] : memref<2x1024xf32, #tpu.memory_space<vmem>>, vector<2x1024xf32>
    %cst = arith.constant 0.000000e+00 : f32
    %1 = vector.broadcast %cst : f32 to vector<2x1024xf32>
    %2 = arith.subf %1, %0 : vector<2x1024xf32>
    %3 = arith.addf %0, %2 : vector<2x1024xf32>
    %c0_1 = arith.constant 0 : index
    %c0_2 = arith.constant 0 : index
    %4 = vector.load %arg1[%c0_1, %c0_2] : memref<2x1024xf32, #tpu.memory_space<vmem>>, vector<2x1024xf32>
    tpu.vector_store %arg1[%c0_1, %c0_2], %3 {strides = array<i32>} : memref<2x1024xf32, #tpu.memory_space<vmem>>, vector<2x1024xf32>,
    return
  }
}

</mosaic_0001>

<llo_original>
// kernel: tpu_custom_call.1
$region0: #{tpu_custom_call.1}
  #allocation0 [shape = 'u32[]', space=smem, size = 0x4, offset = 0x4, fixed_abs, tag = 'smem constant byte address 0x4 - core index']
  #allocation1 [shape = 'u32[144,128]{1,0:T(1,128)}', space=vmem, size = 0x12000, scoped, tag = 'internal scratch']
  %s0 = inlined_call_operand.hbm [shape: f32[2,1024], index: 0, kind: input, shape index: {}]
  %s1 = inlined_call_operand.hbm [shape: f32[2,1024], index: 1, kind: output, shape index: {}]
  %s2 = sld [smem:[#allocation0]]
  $region18: #{tpu_custom_call.1} parent=0
    _
  %s4 = ssub.s32 1, %s2
  %s5 = scalar_select 0, %s4, %s2
  $region1: #{tpu_custom_call.1} parent=0
    #allocation2 [shape = 'u8[8192]{0}', space=vmem, size = 0x2000, scoped, tag = 'input window, operand 0, single buffered']
    #allocation3 [shape = 's32[1]{0}', space=sflag, size = 0x4, scoped, tag = 'scoped memory for tpu_custom_call.1']
    #allocation4 [shape = 's32[1]{0}', space=sflag, size = 0x4, scoped, tag = 'scoped memory for tpu_custom_call.1']
    #allocation5 [shape = 'u8[8192]{0}', space=vmem, size = 0x2000, scoped, tag = 'output window, operand 0, single buffered']
    %6 = vsyncpa [#allocation3], 0
    %7 = vsyncpa [#allocation4], 0
    // Predicated region
    $region2: #{tpu_custom_call.1} parent=1 // pred_check
      _
    $region3: #{tpu_custom_call.1} parent=1 // pred_check_branch
      %9 = sbr.rel (0) target = $region5
    $region4: #{tpu_custom_call.1} parent=1 // pred_region
      %s11 = ssub.s32 256, 256
      %12 = vsyncadd [#allocation3], %s11
      %s14 = sshll.u32 [#allocation2], 4
      %s15 = int_to_ptr.vmem [resolvable:$true] %s14
      %17 = dma.hbm_to_vmem [thread:$0]  %s0, 256, %s15, [#allocation3]
    $region5: #{tpu_custom_call.1} parent=1 // pred_fallthru
      _
    // Predicated region
    $region6: #{tpu_custom_call.1} parent=1 // pred_check
      _
    $region7: #{tpu_custom_call.1} parent=1 // pred_check_branch
      %19 = sbr.rel (0) target = $region9
    $region8: #{tpu_custom_call.1} parent=1 // pred_region
      %20 = dma.done [#allocation3], 256
    $region9: #{tpu_custom_call.1} parent=1 // pred_fallthru
      _
    %v21 = vld [vmem:[#allocation2] sm:$0xff]
    %v22 = vld [vmem:[#allocation2 + $0x8] sm:$0xff]
    %v23 = vsub.f32 0.0, %v21
    %v24 = vsub.f32 0.0, %v22
    %v25 = vadd.f32 %v21, %v23
    %v26 = vadd.f32 %v22, %v24
    %27 = vst [vmem:[#allocation5] sm:$0xff] %v25
    %28 = vst [vmem:[#allocation5 + $0x8] sm:$0xff] %v26
    // Predicated region
    $region10: #{tpu_custom_call.1} parent=1 // pred_check
      _
    $region11: #{tpu_custom_call.1} parent=1 // pred_check_branch
      %30 = sbr.rel (0) target = $region13
    $region12: #{tpu_custom_call.1} parent=1 // pred_region
      %s32 = ssub.s32 256, 256
      %33 = vsyncadd [#allocation4], %s32
      %s35 = sshll.u32 [#allocation5], 4
      %s36 = int_to_ptr.vmem [resolvable:$true] %s35
      %38 = dma.vmem_to_hbm [thread:$0]  %s36, 256, %s1, [#allocation4]
    $region13: #{tpu_custom_call.1} parent=1 // pred_fallthru
      _
    // Predicated region
    $region14: #{tpu_custom_call.1} parent=1 // pred_check
      _
    $region15: #{tpu_custom_call.1} parent=1 // pred_check_branch
      %40 = sbr.rel (0) target = $region17
    $region16: #{tpu_custom_call.1} parent=1 // pred_region
      %41 = dma.done [#allocation4], 256
    $region17: #{tpu_custom_call.1} parent=1 // pred_fallthru
      _
    %42 = vsyncpa [#allocation3], 1
    %43 = vsyncpa [#allocation4], 1

</llo_original>
